<compile_context>
chip_gen: v6e
topology: v6e:2x2x1
jax: 0.10.0
libtpu: 0.0.40
codegen_flags: <defaults>
</compile_context>

<pallas_src>
import jax
import jax.numpy as jnp
import numpy as np
from jax.experimental import pallas as pl
from jax.experimental.pallas import tpu as pltpu

B, T, D, CLIP_DIM = 2, 8, 32, 16   # batch, clip_len, input_feats(=latent_dim), clip_dim
LANE = 128                         # TPU lane width


# ----------------------------------------------------------------------------
# Fused kernel: both CFG branches + combine.  One grid step = one (tile_rows, 128)
# lane-dense row tile of one batch element.  No loops, no masked stores.
#   scale_ref : (B,) f32, SMEM (scalar prefetch)
#   x_ref     : (tile_rows, 128)  lane-dense packing of this batch's (T, D) rows
#   w_ref     : (128, 128)        block-diagonal kron(I_{128/D}, W)
#   te_ref    : (1, 128)          timestep embedding (+ bias) for this batch, lane-tiled
#   ce_ref    : (1, 128)          condition embedding for this batch, lane-tiled
#   o_ref     : (tile_rows, 128)
# ----------------------------------------------------------------------------
def _cfg_fused_kernel(scale_ref, x_ref, w_ref, te_ref, ce_ref, o_ref):
    # Shared trunk, computed ONCE for both CFG branches (single MXU matmul).
    # At these dims (K=128, f32) the default MXU precision passes the 1e-5 check; at
    # larger K either set precision=HIGHEST or deliberately cast inputs to bf16
    # (v6e/v7x) with preferred_element_type=f32 and loosen the tolerance.
    h = jnp.dot(x_ref[...], w_ref[...], preferred_element_type=jnp.float32)
    h = h + te_ref[...]                       # (tile_rows,128) + (1,128) broadcast

    out_uncond = jnp.tanh(h)                  # "uncond" branch: condition embedding dropped
    out_cond = jnp.tanh(h + ce_ref[...])      # conditioned branch

    # out_uncond + scale.view(-1,1,1) * (out - out_uncond); one scalar read, one
    # vectorized combine, one unmasked full-tile store.
    s = scale_ref[pl.program_id(0)]
    o_ref[...] = (out_uncond + s * (out_cond - out_uncond)).astype(o_ref.dtype)


def cfg_pallas_forward(x, t_emb, c_emb, scale, w_dense, b_dense, *, tile_rows=8):
    """Fused cond/uncond forward + CFG combine.

    x: (B, T, D), t_emb/c_emb: (B, D), scale: (B,),
    w_dense: (128, 128) block-diag kron(I, W), b_dense: (1, 128) lane-tiled bias.
    """
    Bs, Ts, Ds = x.shape
    assert LANE % Ds == 0, "lane-dense packing assumes D divides 128"
    reps = LANE // Ds
    assert Ts % reps == 0, "each 128-lane row must stay within one batch element"
    rows_pb = Ts * Ds // LANE                 # real lane-dense rows per batch element
    tiles = pl.cdiv(rows_pb, tile_rows)       # row-tile grid axis (1 at toy dims)
    r_pad = tiles * tile_rows                 # padded to full (8,128) sublane tiles

    # Per-call layout plumbing (only the genuinely data-dependent ops; fuses into a
    # couple of tiny XLA ops):
    x_p = x.reshape(Bs, rows_pb, LANE)
    if r_pad != rows_pb:
        x_p = jnp.pad(x_p, ((0, 0), (0, r_pad - rows_pb), (0, 0)))
    te_p = (jnp.tile(t_emb, (1, reps)) + b_dense).reshape(Bs, 1, LANE)   # bias folded in
    ce_p = jnp.tile(c_emb, (1, reps)).reshape(Bs, 1, LANE)
    scale_f32 = scale.astype(jnp.float32)

    grid_spec = pltpu.PrefetchScalarGridSpec(
        num_scalar_prefetch=1,                # scale -> SMEM, visible to index_maps/kernel
        grid=(Bs, tiles),
        in_specs=[
            # x: one (tile_rows, 128) tile per (batch, row-tile) grid step
            pl.BlockSpec((None, tile_rows, LANE), lambda b, r, s: (b, r, 0)),
            # W: single resident (128,128) block reused by every step
            pl.BlockSpec((LANE, LANE), lambda b, r, s: (0, 0)),
            # embeddings: one (1,128) block per batch, reused across the row-tile axis
            pl.BlockSpec((None, 1, LANE), lambda b, r, s: (b, 0, 0)),
            pl.BlockSpec((None, 1, LANE), lambda b, r, s: (b, 0, 0)),
        ],
        out_specs=pl.BlockSpec((None, tile_rows, LANE), lambda b, r, s: (b, r, 0)),
    )
    out_p = pl.pallas_call(
        _cfg_fused_kernel,
        out_shape=jax.ShapeDtypeStruct((Bs, r_pad, LANE), x.dtype),
        grid_spec=grid_spec,
        # Both axes are independent -> shard across v7x's 2 TensorCores; no-op on v5e/v6e.
        # At real dims, raise tile_rows and budget 2-deep double-buffered tiles against
        # v7x's 64 MiB VMEM (vmem_limit_bytes) instead of keeping everything resident.
        compiler_params=pltpu.CompilerParams(
            dimension_semantics=("parallel", "parallel")),
    )(scale_f32, x_p, w_dense, te_p, ce_p)
    return out_p[:, :rows_pb, :].reshape(Bs, Ts, Ds)


# ----------------------------------------------------------------------------
# Wrapper: constant prep in __init__, data-dependent glue + fused kernel in __call__.
# ----------------------------------------------------------------------------
class ClassifierFreeSampleModel:
    """JAX/Pallas port of the PyTorch ClassifierFreeSampleModel wrapper."""

    def __init__(self, params):
        self.params = params  # {'w': (D,D), 'b': (1,D), 'wc': (CLIP_DIM,D)}
        d = params["w"].shape[0]
        reps = LANE // d
        # Hoisted per-call constants (review: remove per-call XLA launches):
        #   block-diagonal MXU weight, lane-tiled bias, sinusoid frequencies.
        # NOTE: kron(I, W) is only kept while D < 128; at D >= 128 use W directly with a
        # true (B*T, D) @ (D, D) matmul (bf16 inputs + 256-wide tiles on v6e/v7x).
        self.w_dense = jnp.kron(jnp.eye(reps, dtype=params["w"].dtype), params["w"])
        self.b_dense = jnp.tile(params["b"].reshape(1, d), (1, reps))
        half = d // 2
        self.freqs = jnp.exp(
            -jnp.log(10000.0) * jnp.arange(half, dtype=jnp.float32) / half)
        # TODO(synk): the original wrapper only copies config attributes (rot_req,
        # joint_num, clip_len, ...) from the inner model; they carry no compute.

    def _timestep_embedding(self, timesteps):
        args = timesteps.astype(jnp.float32)[:, None] * self.freqs[None, :]
        return jnp.concatenate([jnp.sin(args), jnp.cos(args)], axis=-1)   # (B, D)

    def __call__(self, x, timesteps, y):
        # y_uncond = deepcopy(y); y_uncond['uncond'] = True  -> in this synthetic inner
        # model the uncond branch simply drops the condition embedding, so both CFG
        # branches share h = x@W + b + t_emb and the two forwards + combine fuse into
        # one kernel.  (An arbitrary transformer inner model could not be fused this way.)
        t_emb = self._timestep_embedding(timesteps)          # (B, D)   per-call (data dep)
        c_emb = y["cond"] @ self.params["wc"]                 # (B, D)   per-call (data dep)
        # TODO(synk): in a sampling loop, batch several timesteps/samples into one call
        # (larger row axis) -- at these dims the kernel is pure launch overhead.
        return cfg_pallas_forward(x, t_emb, c_emb, y["scale"],
                                  self.w_dense, self.b_dense)


if __name__ == "__main__":
    key = jax.random.PRNGKey(0)
    k_x, k_c, k_w, k_b, k_wc = jax.random.split(key, 5)

    # deterministic parameters
    params = {
        "w": jax.random.normal(k_w, (D, D), jnp.float32) / jnp.sqrt(D),
        "b": jax.random.normal(k_b, (1, D), jnp.float32) * 0.01,
        "wc": jax.random.normal(k_wc, (CLIP_DIM, D), jnp.float32) / jnp.sqrt(CLIP_DIM),
    }

    # deterministic inputs
    x = jax.random.normal(k_x, (B, T, D), jnp.float32)
    timesteps = jnp.array([10, 500], dtype=jnp.int32)
    y = {
        "cond": jax.random.normal(k_c, (B, CLIP_DIM), jnp.float32),
        "scale": jnp.array([2.5, 7.5], dtype=jnp.float32),
    }

    cfg_model = ClassifierFreeSampleModel(params)
    result = jax.block_until_ready(cfg_model(x, timesteps, y))

    # pure-JAX reference for correctness
    half = D // 2
    freqs = jnp.exp(-jnp.log(10000.0) * jnp.arange(half, dtype=jnp.float32) / half)
    args = timesteps.astype(jnp.float32)[:, None] * freqs[None, :]
    t_emb = jnp.concatenate([jnp.sin(args), jnp.cos(args)], axis=-1)[:, None, :]
    c_emb = (y["cond"] @ params["wc"])[:, None, :]
    h = jnp.einsum("btd,de->bte", x, params["w"]) + params["b"][None] + t_emb
    ref_cond = jnp.tanh(h + c_emb)
    ref_uncond = jnp.tanh(h)
    ref = ref_uncond + y["scale"][:, None, None] * (ref_cond - ref_uncond)

    np.testing.assert_allclose(np.asarray(result), np.asarray(ref), rtol=1e-5, atol=1e-5)
    print("KERNEL_OK")
</pallas_src>

<mosaic_0001>
module attributes {stable_mosaic.version = 11 : i64} {
  func.func @_cfg_fused_kernel(%arg0: i32, %arg1: i32, %arg2: memref<2xf32, #tpu.memory_space<smem>>, %arg3: memref<1x8x128xf32, #tpu.memory_space<vmem>>, %arg4: memref<128x128xf32, #tpu.memory_space<vmem>>, %arg5: memref<1x1x128xf32, #tpu.memory_space<vmem>>, %arg6: memref<1x1x128xf32, #tpu.memory_space<vmem>>, %arg7: memref<1x8x128xf32, #tpu.memory_space<vmem>>) attributes {dimension_semantics = [#tpu.dimension_semantics<parallel>, #tpu.dimension_semantics<parallel>], iteration_bounds = array<i64: 2, 1>, scalar_prefetch = 1 : i64, scratch_operands = 0 : i64, tpu.core_type = #tpu.core_type<tc>, window_params = [{transform_indices = @transform_0, window_bounds = array<i64: 1, 8, 128>}, {pipeline_mode = #tpu.pipeline_mode<synchronous>, transform_indices = @transform_1, window_bounds = array<i64: 128, 128>}, {transform_indices = @transform_2, window_bounds = array<i64: 1, 1, 128>}, {transform_indices = @transform_3, window_bounds = array<i64: 1, 1, 128>}, {transform_indices = @transform_4, window_bounds = array<i64: 1, 8, 128>}]} {
    %c0 = arith.constant 0 : index
    %c0_0 = arith.constant 0 : index
    %c0_1 = arith.constant 0 : index
    %0 = vector.load %arg3[%c0, %c0_0, %c0_1] : memref<1x8x128xf32, #tpu.memory_space<vmem>>, vector<1x8x128xf32>
    %1 = vector.shape_cast %0 : vector<1x8x128xf32> to vector<8x128xf32>
    %c0_2 = arith.constant 0 : index
    %c0_3 = arith.constant 0 : index
    %2 = vector.load %arg4[%c0_2, %c0_3] : memref<128x128xf32, #tpu.memory_space<vmem>>, vector<128x128xf32>
    %cst = arith.constant dense<0.000000e+00> : vector<8x128xf32>
    %3 = tpu.matmul %1, %2, %cst {dimension_numbers = #tpu.dot_dimension_numbers<[1], [0], [0], [1], [0, 0, 1, 1], [], []>} : vector<8x128xf32>, vector<128x128xf32>, vector<8x128xf32> -> vector<8x128xf32>
    %c0_4 = arith.constant 0 : index
    %c0_5 = arith.constant 0 : index
    %c0_6 = arith.constant 0 : index
    %4 = vector.load %arg5[%c0_4, %c0_5, %c0_6] : memref<1x1x128xf32, #tpu.memory_space<vmem>>, vector<1x1x128xf32>
    %5 = vector.shape_cast %4 : vector<1x1x128xf32> to vector<1x128xf32>
    %6 = vector.broadcast %5 : vector<1x128xf32> to vector<8x128xf32>
    %7 = arith.addf %3, %6 : vector<8x128xf32>
    %8 = math.tanh %7 : vector<8x128xf32>
    %c0_7 = arith.constant 0 : index
    %c0_8 = arith.constant 0 : index
    %c0_9 = arith.constant 0 : index
    %9 = vector.load %arg6[%c0_7, %c0_8, %c0_9] : memref<1x1x128xf32, #tpu.memory_space<vmem>>, vector<1x1x128xf32>
    %10 = vector.shape_cast %9 : vector<1x1x128xf32> to vector<1x128xf32>
    %11 = vector.broadcast %10 : vector<1x128xf32> to vector<8x128xf32>
    %12 = arith.addf %7, %11 : vector<8x128xf32>
    %13 = math.tanh %12 : vector<8x128xf32>
    %14 = arith.index_cast %arg0 : i32 to index
    %15 = memref.load %arg2[%14] : memref<2xf32, #tpu.memory_space<smem>>
    %16 = arith.subf %13, %8 : vector<8x128xf32>
    %17 = vector.broadcast %15 : f32 to vector<8x128xf32>
    %18 = arith.mulf %17, %16 : vector<8x128xf32>
    %19 = arith.addf %8, %18 : vector<8x128xf32>
    %c0_10 = arith.constant 0 : index
    %c0_11 = arith.constant 0 : index
    %c0_12 = arith.constant 0 : index
    %20 = vector.load %arg7[%c0_10, %c0_11, %c0_12] : memref<1x8x128xf32, #tpu.memory_space<vmem>>, vector<1x8x128xf32>
    %21 = vector.shape_cast %20 : vector<1x8x128xf32> to vector<8x128xf32>
    %22 = vector.shape_cast %19 : vector<8x128xf32> to vector<1x8x128xf32>
    tpu.vector_store %arg7[%c0_10, %c0_11, %c0_12], %22 {strides = array<i32>} : memref<1x8x128xf32, #tpu.memory_space<vmem>>, vector<1x8x128xf32>,
    return
  }
  func.func @transform_0(%arg0: i32, %arg1: i32, %arg2: memref<2xf32, #tpu.memory_space<smem>>) -> (i32, i32, i32) {
    %c0_i32 = arith.constant 0 : i32
    %c0_i32_0 = arith.constant 0 : i32
    return %arg0, %arg1, %c0_i32 : i32, i32, i32
  }
  func.func @transform_1(%arg0: i32, %arg1: i32, %arg2: memref<2xf32, #tpu.memory_space<smem>>) -> (i32, i32) {
    %c0_i32 = arith.constant 0 : i32
    %c0_i32_0 = arith.constant 0 : i32
    %c0_i32_1 = arith.constant 0 : i32
    return %c0_i32, %c0_i32_0 : i32, i32
  }
  func.func @transform_2(%arg0: i32, %arg1: i32, %arg2: memref<2xf32, #tpu.memory_space<smem>>) -> (i32, i32, i32) {
    %c0_i32 = arith.constant 0 : i32
    %c0_i32_0 = arith.constant 0 : i32
    %c0_i32_1 = arith.constant 0 : i32
    return %arg0, %c0_i32, %c0_i32_0 : i32, i32, i32
  }
  func.func @transform_3(%arg0: i32, %arg1: i32, %arg2: memref<2xf32, #tpu.memory_space<smem>>) -> (i32, i32, i32) {
    %c0_i32 = arith.constant 0 : i32
    %c0_i32_0 = arith.constant 0 : i32
    %c0_i32_1 = arith.constant 0 : i32
    return %arg0, %c0_i32, %c0_i32_0 : i32, i32, i32
  }
  func.func @transform_4(%arg0: i32, %arg1: i32, %arg2: memref<2xf32, #tpu.memory_space<smem>>) -> (i32, i32, i32) {
    %c0_i32 = arith.constant 0 : i32
    %c0_i32_0 = arith.constant 0 : i32
    return %arg0, %arg1, %c0_i32 : i32, i32, i32
  }
}

</mosaic_0001>

<llo_original>
// kernel: tpu_custom_call.1
$region0: #{tpu_custom_call.1}
  #allocation0 [shape = 'u32[]', space=smem, size = 0x4, offset = 0x4, fixed_abs, tag = 'smem constant byte address 0x4 - core index']
  #allocation1 [shape = 'u32[144,128]{1,0:T(1,128)}', space=vmem, size = 0x12000, scoped, tag = 'internal scratch']
  #allocation2 [shape = 's32[1]{0}', space=sflag, size = 0x4, scoped, tag = 'scoped memory for tpu_custom_call.1']
  #allocation3 [shape = 'u8[512]{0}', space=smem, size = 0x200, scoped, tag = 'prefetched SMEM operand 0']
  %s0 = inlined_call_operand.hbm [shape: f32[2], index: 0, kind: input, shape index: {}]
  %s1 = inlined_call_operand.hbm [shape: f32[2,8,128], index: 1, kind: input, shape index: {}]
  %s2 = inlined_call_operand.hbm [shape: f32[128,128], index: 2, kind: input, shape index: {}]
  %s3 = inlined_call_operand.vmem [shape: f32[2,1,128], index: 3, kind: input, shape index: {}]
  %s4 = inlined_call_operand.vmem [shape: f32[2,1,128], index: 4, kind: input, shape index: {}]
  %s5 = inlined_call_operand.hbm [shape: f32[2,8,128], index: 5, kind: output, shape index: {}]
  %s6 = sld [smem:[#allocation0]]
  $region57: #{tpu_custom_call.1} parent=0
    _
  %s8 = ssub.s32 1, %s6
  %s9 = scalar_select 0, %s8, %s6
  %11 = dma.hbm_to_smem %s0, 16, [#allocation3], [#allocation2]
  %12 = dma.done [#allocation2], 16
  %13 = sfence
  $region1: #{tpu_custom_call.1} parent=0
    #allocation4 [shape = 'u8[8192]{0}', space=vmem, size = 0x2000, scoped, tag = 'input window, operand 1']
    #allocation5 [shape = 's32[2]{0}', space=sflag, size = 0x8, scoped, tag = 'scoped memory for tpu_custom_call.1']
    #allocation6 [shape = 's32[2]{0}', space=sflag, size = 0x8, scoped, tag = 'scoped memory for tpu_custom_call.1']
    #allocation7 [shape = 'u8[65536]{0}', space=vmem, size = 0x10000, scoped, tag = 'input window, operand 2, single buffered']
    #allocation8 [shape = 's32[1]{0}', space=sflag, size = 0x4, scoped, tag = 'scoped memory for tpu_custom_call.1']
    #allocation9 [shape = 'u8[8192]{0}', space=vmem, size = 0x2000, scoped, tag = 'output window, operand 0']
    %14 = vsyncpa [#allocation5], 0
    %s15 = scalar_lea.sflag [#allocation5], 1
    %16 = vsyncpa %s15, 0
    %17 = vsyncpa [#allocation8], 0
    %18 = vsyncpa [#allocation6], 0
    %s19 = scalar_lea.sflag [#allocation6], 1
    %20 = vsyncpa %s19, 0
    loop: start=0, step=1, limit=4
    $region2: #{tpu_custom_call.1} parent=1 // loop_pre_header
      _
    $region3: #{tpu_custom_call.1} parent=1 // loop_header
      %s22 = sphi 0, %s26
      %p23 = scmp.ge.s32.totalorder %s22, 4
      %s29 = sphi 0, %s41
      %s30 = sphi 0, %s37
      %s31 = sphi 0, %s29
      %s32 = sphi 0, %s30
      %s33 = sphi 0, %s31
      %s34 = sphi 0, %s32
      %s46 = sphi 0, %s48
      %s49 = sphi 0, %s46
      %s50 = sphi 0, %s49
      %s66 = sphi 0, %s50
      %s70 = sphi 0, %s70
      %s72 = sphi 0, %s70
      %s73 = sphi 0, %s72
      %s87 = sphi 0, %s73
      %s93 = sphi 0, %s95
      %s96 = sphi 0, %s93
      %s97 = sphi 0, %s96
      %s113 = sphi 0, %s97
      %s119 = sphi 0, %s121
      %s122 = sphi 0, %s119
      %s123 = sphi 0, %s122
      %s139 = sphi 0, %s123
      %s147 = sphi 0, %s149
      %s150 = sphi 0, %s147
      %s151 = sphi 0, %s150
      %s167 = sphi 0, %s151
    $region4: #{tpu_custom_call.1} parent=1 // loop_header_branch
      %25 = sbr.rel (%p23) target = $region8
    $region5: #{tpu_custom_call.1} parent=1 // loop_body
      %s27 = ssub.s32 %s22, 1
      %s28 = ssub.s32 %s22, 2
      %s35 = sadd.s32 1, %s30
      %p36 = scmp.ge.s32.totalorder %s35, 1
      %s37 = scalar_select %p36, 0, %s35
      %s38 = sadd.s32 1, %s29
      %s39 = scalar_select %p36, %s38, %s29
      %p40 = scmp.ge.s32.totalorder %s39, 2
      %s41 = scalar_select %p40, 0, %s39
      %s42 = ssub.s32 %s29, %s41
      %s43 = ssub.s32 %s30, %s37
      %s44 = sor.u32 %s42, %s43
      %p45 = scmp.eq.s32.totalorder %s44, 0
      %s47 = sadd.s32 %s46, 1
      %s48 = scalar_select %p45, %s46, %s47
      %p51 = pneg %p45
      %p52 = scmp.eq.s32.totalorder %s22, 1
      %p53 = por %p51, %p52
      %p54 = scmp.ne.s32.totalorder %s46, %s49
      %p55 = scmp.eq.s32.totalorder %s22, 0
      %p56 = por %p54, %p55
      %p57 = scmp.ne.s32.totalorder %s46, %s49
      %p58 = scmp.eq.s32.totalorder %s27, 1
      %p59 = por %p57, %p58
      %p60 = scmp.ne.s32.totalorder %s49, %s50
      %p61 = scmp.eq.s32.totalorder %s27, 0
      %p62 = por %p60, %p61
      %p63 = scmp.ne.s32.totalorder %s49, %s50
      %p64 = scmp.eq.s32.totalorder %s28, 1
      %p65 = por %p63, %p64
      %p67 = scmp.ne.s32.totalorder %s50, %s66
      %p68 = scmp.eq.s32.totalorder %s28, 0
      %p69 = por %p67, %p68
      %s71 = sadd.s32 %s70, 1
      %p74 = scmp.eq.s32.totalorder %s22, 1
      %p75 = scmp.ne.s32.totalorder %s70, %s72
      %p76 = scmp.eq.s32.totalorder %s22, 0
      %p77 = por %p75, %p76
      %p78 = scmp.ne.s32.totalorder %s70, %s72
      %p79 = scmp.eq.s32.totalorder %s27, 1
      %p80 = por %p78, %p79
      %p81 = scmp.ne.s32.totalorder %s72, %s73
      %p82 = scmp.eq.s32.totalorder %s27, 0
      %p83 = por %p81, %p82
      %p84 = scmp.ne.s32.totalorder %s72, %s73
      %p85 = scmp.eq.s32.totalorder %s28, 1
      %p86 = por %p84, %p85
      %p88 = scmp.ne.s32.totalorder %s73, %s87
      %p89 = scmp.eq.s32.totalorder %s28, 0
      %p90 = por %p88, %p89
      %s91 = ssub.s32 %s29, %s41
      %p92 = scmp.eq.s32.totalorder %s91, 0
      %s94 = sadd.s32 %s93, 1
      %s95 = scalar_select %p92, %s93, %s94
      %p98 = pneg %p92
      %p99 = scmp.eq.s32.totalorder %s22, 1
      %p100 = por %p98, %p99
      %p101 = scmp.ne.s32.totalorder %s93, %s96
      %p102 = scmp.eq.s32.totalorder %s22, 0
      %p103 = por %p101, %p102
      %p104 = scmp.ne.s32.totalorder %s93, %s96
      %p105 = scmp.eq.s32.totalorder %s27, 1
      %p106 = por %p104, %p105
      %p107 = scmp.ne.s32.totalorder %s96, %s97
      %p108 = scmp.eq.s32.totalorder %s27, 0
      %p109 = por %p107, %p108
      %p110 = scmp.ne.s32.totalorder %s96, %s97
      %p111 = scmp.eq.s32.totalorder %s28, 1
      %p112 = por %p110, %p111
      %p114 = scmp.ne.s32.totalorder %s97, %s113
      %p115 = scmp.eq.s32.totalorder %s28, 0
      %p116 = por %p114, %p115
      %s117 = ssub.s32 %s29, %s41
      %p118 = scmp.eq.s32.totalorder %s117, 0
      %s120 = sadd.s32 %s119, 1
      %s121 = scalar_select %p118, %s119, %s120
      %p124 = pneg %p118
      %p125 = scmp.eq.s32.totalorder %s22, 1
      %p126 = por %p124, %p125
      %p127 = scmp.ne.s32.totalorder %s119, %s122
      %p128 = scmp.eq.s32.totalorder %s22, 0
      %p129 = por %p127, %p128
      %p130 = scmp.ne.s32.totalorder %s119, %s122
      %p131 = scmp.eq.s32.totalorder %s27, 1
      %p132 = por %p130, %p131
      %p133 = scmp.ne.s32.totalorder %s122, %s123
      %p134 = scmp.eq.s32.totalorder %s27, 0
      %p135 = por %p133, %p134
      %p136 = scmp.ne.s32.totalorder %s122, %s123
      %p137 = scmp.eq.s32.totalorder %s28, 1
      %p138 = por %p136, %p137
      %p140 = scmp.ne.s32.totalorder %s123, %s139
      %p141 = scmp.eq.s32.totalorder %s28, 0
      %p142 = por %p140, %p141
      %s143 = ssub.s32 %s29, %s41
      %s144 = ssub.s32 %s30, %s37
      %s145 = sor.u32 %s143, %s144
      %p146 = scmp.eq.s32.totalorder %s145, 0
      %s148 = sadd.s32 %s147, 1
      %s149 = scalar_select %p146, %s147, %s148
      %p152 = pneg %p146
      %p153 = scmp.eq.s32.totalorder %s22, 1
      %p154 = por %p152, %p153
      %p155 = scmp.ne.s32.totalorder %s147, %s150
      %p156 = scmp.eq.s32.totalorder %s22, 0
      %p157 = por %p155, %p156
      %p158 = scmp.ne.s32.totalorder %s147, %s150
      %p159 = scmp.eq.s32.totalorder %s27, 1
      %p160 = por %p158, %p159
      %p161 = scmp.ne.s32.totalorder %s150, %s151
      %p162 = scmp.eq.s32.totalorder %s27, 0
      %p163 = por %p161, %p162
      %p164 = scmp.ne.s32.totalorder %s150, %s151
      %p165 = scmp.eq.s32.totalorder %s28, 1
      %p166 = por %p164, %p165
      %p168 = scmp.ne.s32.totalorder %s151, %s167
      %p169 = scmp.eq.s32.totalorder %s28, 0
      %p170 = por %p168, %p169
      %p171 = scmp.le.s32.totalorder 1, %s22
      %p172 = scmp.lt.s32.totalorder %s22, 3
      %p173 = pnand %p171, %p172
      %p174 = pneg %p173
      // Predicated region
      $region9: #{tpu_custom_call.1} parent=5 // pred_check
        _
      $region10: #{tpu_custom_call.1} parent=5 // pred_check_branch
        %176 = sbr.rel (%p173) target = $region12
      $region11: #{tpu_custom_call.1} parent=5 // pred_region
        %s177 = ssub.s32 %s22, 1
        // Predicated region
        $region13: #{tpu_custom_call.1} parent=11 // pred_check
          %p178 = pneg %p83
        $region14: #{tpu_custom_call.1} parent=11 // pred_check_branch
          %180 = sbr.rel (%p178) target = $region16
        $region15: #{tpu_custom_call.1} parent=11 // pred_region
          %s182 = ssub.s32 2048, 2048
          %183 = vsyncadd [#allocation8], %s182
          %s184 = sshll.u32 [#allocation7], 4
          %s185 = int_to_ptr.vmem [resolvable:$true] %s184
          %190 = dma.hbm_to_vmem [thread:$0]  %s2, 2048, %s185, [#allocation8], 128, 128, 8
        $region16: #{tpu_custom_call.1} parent=11 // pred_fallthru
          _
      $region12: #{tpu_custom_call.1} parent=5 // pred_fallthru
        _
      %p191 = scmp.lt.s32.totalorder %s22, 2
      // Predicated region
      $region17: #{tpu_custom_call.1} parent=5 // pred_check
        %p192 = pneg %p191
      $region18: #{tpu_custom_call.1} parent=5 // pred_check_branch
        %194 = sbr.rel (%p192) target = $region20
      $region19: #{tpu_custom_call.1} parent=5 // pred_region
        // Predicated region
        $region21: #{tpu_custom_call.1} parent=19 // pred_check
          %p195 = pneg %p56
        $region22: #{tpu_custom_call.1} parent=19 // pred_check_branch
          %197 = sbr.rel (%p195) target = $region24
        $region23: #{tpu_custom_call.1} parent=19 // pred_region
          %s198 = sand.u32 %s46, 1
          %s199 = scalar_lea.sflag [#allocation5], %s198
          %s200 = sand.u32 %s46, 1
          %s201 = smul.addr %s200, 8
          %s202 = scalar_lea.vmem [#allocation4], %s201
          %s204 = ssub.s32 128, 128
          %205 = vsyncadd %s199, %s204
          %s206 = sadd.s32 %s30, %s29
          %s207 = smul.addr %s206, 128
          %s208 = scalar_lea.hbm %s1, %s207
          %s210 = sshll.u32 %s202, 4
          %s211 = int_to_ptr.vmem [resolvable:$true] %s210
          %213 = dma.hbm_to_vmem [thread:$0]  %s208, 128, %s211, %s199
        $region24: #{tpu_custom_call.1} parent=19 // pred_fallthru
          _
        // Predicated region
        $region25: #{tpu_custom_call.1} parent=19 // pred_check
          %p214 = pneg %p103
        $region26: #{tpu_custom_call.1} parent=19 // pred_check_branch
          %216 = sbr.rel (%p214) target = $region28
        $region27: #{tpu_custom_call.1} parent=19 // pred_region
          %p217 = scmp.lt.s32.totalorder %s29, 1
          %s218 = scalar_select %p217, %s29, 1
          %s219 = scalar_lea.vmem %s3, %s218
        $region28: #{tpu_custom_call.1} parent=19 // pred_fallthru
          _
        // Predicated region
        $region29: #{tpu_custom_call.1} parent=19 // pred_check
          %p220 = pneg %p129
        $region30: #{tpu_custom_call.1} parent=19 // pred_check_branch
          %222 = sbr.rel (%p220) target = $region32
        $region31: #{tpu_custom_call.1} parent=19 // pred_region
          %p223 = scmp.lt.s32.totalorder %s29, 1
          %s224 = scalar_select %p223, %s29, 1
          %s225 = scalar_lea.vmem %s4, %s224
        $region32: #{tpu_custom_call.1} parent=19 // pred_fallthru
          _
      $region20: #{tpu_custom_call.1} parent=5 // pred_fallthru
        _
      %p226 = scmp.le.s32.totalorder 1, %s22
      %p227 = scmp.lt.s32.totalorder %s22, 3
      %p228 = pnand %p226, %p227
      %p229 = pneg %p228
      // Predicated region
      $region33: #{tpu_custom_call.1} parent=5 // pred_check
        _
      $region34: #{tpu_custom_call.1} parent=5 // pred_check_branch
        %231 = sbr.rel (%p228) target = $region36
      $region35: #{tpu_custom_call.1} parent=5 // pred_region
        %s232 = ssub.s32 %s22, 1
        %s233 = sand.u32 %s49, 1
        %s234 = scalar_lea.sflag [#allocation5], %s233
        %s235 = sand.u32 %s49, 1
        %s236 = smul.addr %s235, 8
        %s237 = scalar_lea.vmem [#allocation4], %s236
        // Predicated region
        $region37: #{tpu_custom_call.1} parent=35 // pred_check
          %p238 = pneg %p62
        $region38: #{tpu_custom_call.1} parent=35 // pred_check_branch
          %240 = sbr.rel (%p238) target = $region40
        $region39: #{tpu_custom_call.1} parent=35 // pred_region
          %241 = dma.done %s234, 128
        $region40: #{tpu_custom_call.1} parent=35 // pred_fallthru
          _
        // Predicated region
        $region41: #{tpu_custom_call.1} parent=35 // pred_check
          %p242 = pneg %p83
        $region42: #{tpu_custom_call.1} parent=35 // pred_check_branch
          %244 = sbr.rel (%p242) target = $region44
        $region43: #{tpu_custom_call.1} parent=35 // pred_region
          %245 = dma.done [#allocation8], 2048
        $region44: #{tpu_custom_call.1} parent=35 // pred_fallthru
          _
        %s246 = sand.u32 %s49, 1
        %s247 = scalar_lea.sflag [#allocation5], %s246
        %s248 = sand.u32 %s49, 1
        %s249 = smul.addr %s248, 8
        %s250 = scalar_lea.vmem [#allocation4], %s249
        %p251 = pneg %p62
        %p252 = pneg %p59
        %p253 = pneg %p83
        %p254 = pneg %p80
        %p255 = scmp.lt.s32.totalorder %s31, 1
        %s256 = scalar_select %p255, %s31, 1
        %s257 = scalar_lea.vmem %s3, %s256
        %p258 = pneg %p109
        %p259 = pneg %p106
        %p260 = scmp.lt.s32.totalorder %s31, 1
        %s261 = scalar_select %p260, %s31, 1
        %s262 = scalar_lea.vmem %s4, %s261
        %p263 = pneg %p135
        %p264 = pneg %p132
        %p265 = pneg %p163
        %p266 = pneg %p160
        %s267 = sand.u32 %s150, 1
        %s268 = scalar_lea.sflag [#allocation6], %s267
        %s269 = sand.u32 %s150, 1
        %s270 = smul.addr %s269, 8
        %s271 = scalar_lea.vmem [#allocation9], %s270
        %p272 = scmp.lt.s32.totalorder %s31, 1
        %s273 = scalar_select %p272, %s31, 1
        %s274 = scalar_lea.vmem %s3, %s273
        %p275 = scmp.lt.s32.totalorder %s31, 1
        %s276 = scalar_select %p275, %s31, 1
        %s277 = scalar_lea.vmem %s4, %s276
        %v278 = vld [vmem:[%s237] sm:$0xff]
        %v279 = vld [vmem:[#allocation7] sm:$0xff]
        %v280 = vld [vmem:[#allocation7 + $0x8] sm:$0xff]
        %v281 = vld [vmem:[#allocation7 + $0x10] sm:$0xff]
        %v282 = vld [vmem:[#allocation7 + $0x18] sm:$0xff]
        %v283 = vld [vmem:[#allocation7 + $0x20] sm:$0xff]
        %v284 = vld [vmem:[#allocation7 + $0x28] sm:$0xff]
        %v285 = vld [vmem:[#allocation7 + $0x30] sm:$0xff]
        %v286 = vld [vmem:[#allocation7 + $0x38] sm:$0xff]
        %v287 = vld [vmem:[#allocation7 + $0x40] sm:$0xff]
        %v288 = vld [vmem:[#allocation7 + $0x48] sm:$0xff]
        %v289 = vld [vmem:[#allocation7 + $0x50] sm:$0xff]
        %v290 = vld [vmem:[#allocation7 + $0x58] sm:$0xff]
        %v291 = vld [vmem:[#allocation7 + $0x60] sm:$0xff]
        %v292 = vld [vmem:[#allocation7 + $0x68] sm:$0xff]
        %v293 = vld [vmem:[#allocation7 + $0x70] sm:$0xff]
        %v294 = vld [vmem:[#allocation7 + $0x78] sm:$0xff]
        %v295 = vld [vmem:[%s274] sm:$0x1]
        %v297 = vlaneseq
        %v298 = vshrl.u32 %v297, 7
        %v299 = vsub.s32 0, %v298
        %v300 = vrot.slane %v295, %v299
        %302 = vmatprep.subr.mxu0 0.0
        %303 = vmatpush1.msra.mxu0 %v294
        %304 = vmatprep.subr.mxu0 0.0
        %305 = vmatpush1.msra.mxu0 %v293
        %306 = vmatprep.subr.mxu0 0.0
        %307 = vmatpush1.msra.mxu0 %v292
        %308 = vmatprep.subr.mxu0 0.0
        %309 = vmatpush1.msra.mxu0 %v291
        %310 = vmatprep.subr.mxu0 0.0
        %311 = vmatpush1.msra.mxu0 %v290
        %312 = vmatprep.subr.mxu0 0.0
        %313 = vmatpush1.msra.mxu0 %v289
        %314 = vmatprep.subr.mxu0 0.0
        %315 = vmatpush1.msra.mxu0 %v288
        %316 = vmatprep.subr.mxu0 0.0
        %317 = vmatpush1.msra.mxu0 %v287
        %318 = vmatprep.subr.mxu0 0.0
        %319 = vmatpush1.msra.mxu0 %v286
        %320 = vmatprep.subr.mxu0 0.0
        %321 = vmatpush1.msra.mxu0 %v285
        %322 = vmatprep.subr.mxu0 0.0
        %323 = vmatpush1.msra.mxu0 %v284
        %324 = vmatprep.subr.mxu0 0.0
        %325 = vmatpush1.msra.mxu0 %v283
        %326 = vmatprep.subr.mxu0 0.0
        %327 = vmatpush1.msra.mxu0 %v282
        %328 = vmatprep.subr.mxu0 0.0
        %329 = vmatpush1.msra.mxu0 %v281
        %330 = vmatprep.subr.mxu0 0.0
        %331 = vmatpush1.msra.mxu0 %v280
        %332 = vmatprep.subr.mxu0 0.0
        %333 = vmatpush1.msra.mxu0 %v279
        %334 = vmatprep.subr.mxu0 0.0
        %335 = vmatpush2.msra.mxu0 0.0
        %336 = vmatprep.subr.mxu0 0.0
        %337 = vmatpush2.msra.mxu0 0.0
        %338 = vmatprep.subr.mxu0 0.0
        %339 = vmatpush2.msra.mxu0 0.0
        %340 = vmatprep.subr.mxu0 0.0
        %341 = vmatpush2.msra.mxu0 0.0
        %342 = vmatprep.subr.mxu0 0.0
        %343 = vmatpush2.msra.mxu0 0.0
        %344 = vmatprep.subr.mxu0 0.0
        %345 = vmatpush2.msra.mxu0 0.0
        %346 = vmatprep.subr.mxu0 0.0
        %347 = vmatpush2.msra.mxu0 0.0
        %348 = vmatprep.subr.mxu0 0.0
        %349 = vmatpush2.msra.mxu0 0.0
        %350 = vmatprep.subr.mxu0 0.0
        %351 = vmatpush2.msra.mxu0 0.0
        %352 = vmatprep.subr.mxu0 0.0
        %353 = vmatpush2.msra.mxu0 0.0
        %354 = vmatprep.subr.mxu0 0.0
        %355 = vmatpush2.msra.mxu0 0.0
        %356 = vmatprep.subr.mxu0 0.0
        %357 = vmatpush2.msra.mxu0 0.0
        %358 = vmatprep.subr.mxu0 0.0
        %359 = vmatpush2.msra.mxu0 0.0
        %360 = vmatprep.subr.mxu0 0.0
        %361 = vmatpush2.msra.mxu0 0.0
        %362 = vmatprep.subr.mxu0 0.0
        %363 = vmatpush2.msra.mxu0 0.0
        %364 = vmatprep.subr.mxu0 0.0
        %365 = vmatpush2.msra.mxu0 0.0
        %366 = vmatprep.mubr.f32.mxu0 0.0
        %367 = vmatmul.mubr.f32.gmra.mxu0 %v278
        %v368 = vpop.f32.mrf.mxu0
        %v369 = vadd.f32 %v300, %v368
        %v370 = vpop.f32.mrf.mxu0
        %371 = vdwg.mxu0
        %v372 = vtanh.pop %v369
        %v373 = vld [vmem:[%s277] sm:$0x1]
        %v375 = vlaneseq
        %v376 = vshrl.u32 %v375, 7
        %v377 = vsub.s32 0, %v376
        %v378 = vrot.slane %v373, %v377
        %v380 = vadd.f32 %v369, %v378
        %v381 = vtanh.pop %v380
        %s382 = sld [smem:[#allocation3 + %s31]]
        %v383 = vsub.f32 %v381, %v372
        %v384 = vstv %s382
        %v385 = vmul.f32 %v384, %v383
        %v386 = vadd.f32 %v372, %v385
        %387 = vst [vmem:[%s271] sm:$0xff] %v386
        %s388 = sand.u32 %s150, 1
        %s389 = scalar_lea.sflag [#allocation6], %s388
        %s390 = sand.u32 %s150, 1
        %s391 = smul.addr %s390, 8
        %s392 = scalar_lea.vmem [#allocation9], %s391
        // Predicated region
        $region45: #{tpu_custom_call.1} parent=35 // pred_check
          %p393 = pneg %p160
        $region46: #{tpu_custom_call.1} parent=35 // pred_check_branch
          %395 = sbr.rel (%p393) target = $region48
        $region47: #{tpu_custom_call.1} parent=35 // pred_region
          %s397 = ssub.s32 128, 128
          %398 = vsyncadd %s389, %s397
          %s399 = sadd.s32 %s32, %s31
          %s400 = smul.addr %s399, 128
          %s401 = scalar_lea.hbm %s5, %s400
          %s403 = sshll.u32 %s392, 4
          %s404 = int_to_ptr.vmem [resolvable:$true] %s403
          %406 = dma.vmem_to_hbm [thread:$0]  %s404, 128, %s401, %s389
        $region48: #{tpu_custom_call.1} parent=35 // pred_fallthru
          _
      $region36: #{tpu_custom_call.1} parent=5 // pred_fallthru
        _
      %p407 = scmp.le.s32.totalorder 2, %s22
      // Predicated region
      $region49: #{tpu_custom_call.1} parent=5 // pred_check
        %p408 = pneg %p407
      $region50: #{tpu_custom_call.1} parent=5 // pred_check_branch
        %410 = sbr.rel (%p408) target = $region52
      $region51: #{tpu_custom_call.1} parent=5 // pred_region
        %s411 = ssub.s32 %s22, 2
        // Predicated region
        $region53: #{tpu_custom_call.1} parent=51 // pred_check
          %p412 = pneg %p166
        $region54: #{tpu_custom_call.1} parent=51 // pred_check_branch
          %414 = sbr.rel (%p412) target = $region56
        $region55: #{tpu_custom_call.1} parent=51 // pred_region
          %s415 = sand.u32 %s151, 1
          %s416 = scalar_lea.sflag [#allocation6], %s415
          %s417 = sand.u32 %s151, 1
          %s418 = smul.addr %s417, 8
          %s419 = scalar_lea.vmem [#allocation9], %s418
          %420 = dma.done %s416, 128
        $region56: #{tpu_custom_call.1} parent=51 // pred_fallthru
          _
      $region52: #{tpu_custom_call.1} parent=5 // pred_fallthru
        _
    $region6: #{tpu_custom_call.1} parent=1 // loop_footer
      %s26 = sadd.s32 1, %s22
    $region7: #{tpu_custom_call.1} parent=1 // loop_footer_branch
      %21 = sbr.rel target = $region3
    $region8: #{tpu_custom_call.1} parent=1 // loop_exit
      _
    %421 = vsyncpa [#allocation5], 1
    %s422 = scalar_lea.sflag [#allocation5], 1
    %423 = vsyncpa %s422, 1
    %424 = vsyncpa [#allocation8], 1
    %425 = vsyncpa [#allocation6], 1
    %s426 = scalar_lea.sflag [#allocation6], 1
    %427 = vsyncpa %s426, 1

</llo_original>
